<compile_context>
chip_gen: v5e
topology: v5e:2x2
jax: 0.10.0
libtpu: 0.0.40
codegen_flags: <defaults>
</compile_context>

<pallas_src>
import jax
import jax.numpy as jnp
from jax.experimental import pallas as pl
from jax.experimental.pallas import tpu as pltpu

LANE = 128

_GAMMA = 2.0
_ALPHA = 0.25
_SMOOTH = 1.0
_WEIGHT = 20.0
_IOU_SCALE = 1.0

_MAX_ROW_TILE = 2048   # 2048x128 f32 tile = 1 MiB; 2 inputs x 2 buffers = 4 MiB VMEM
_PAD_LOGIT = -100.0    # sigmoid(-100) == 0 at f32 precision -> padded elems are inert
_NUM_PARTIALS = 4      # sum(p), sum(mask), sum(p*mask), sum(elementwise focal loss)


def _partials_kernel(pred_ref, mask_ref, out_ref):
    """Grid = (num_slices, steps).  Axis 0: parallel slices (megacore on v7x);
    axis 1: row tiles of the [rows, 128] slab (accumulation axis).

    out_ref: (4, 8, 128) f32 block (one per slice), resident across axis 1.
      0: sum sigmoid(pred)   1: sum mask   2: sum sigmoid(pred)*mask
      3: sum elementwise focal loss (pos+neg merged)
    Cross-lane/sublane reductions and the scalar combine happen outside the kernel.
    """
    j = pl.program_id(1)

    @pl.when(j == 0)
    def _():
        out_ref[...] = jnp.zeros_like(out_ref)

    x = pred_ref[...].astype(jnp.float32)   # stream native dtype; cast in-register
    m = mask_ref[...].astype(jnp.float32)

    # Stable log-sigmoid path: 1 exp + 1 log + 1 reciprocal per element.
    ax = jnp.abs(x)
    t = jnp.exp(-ax)                         # exp(-|x|) in (0, 1]
    sp = jnp.log(1.0 + t)                    # softplus(-|x|)
    log_p = -(jnp.maximum(-x, 0.0) + sp)     # log(sigmoid(x))
    log_q = -(jnp.maximum(x, 0.0) + sp)      # log(1 - sigmoid(x))
    inv = 1.0 / (1.0 + t)
    p = jnp.where(x >= 0.0, inv, t * inv)    # sigmoid(x), stable in both tails

    omp = 1.0 - p
    # focal elementwise: -a*m*(1-p)^2*log(p) - (1-a)*(1-m)*p^2*log(1-p)   (gamma=2)
    loss = (-_ALPHA) * m * (omp * omp) * log_p + \
           (_ALPHA - 1.0) * (1.0 - m) * (p * p) * log_q

    def fold(v):
        # (tr,128) -> (tr//8, 8, 128) -> sum over axis 0: full-vreg VPU adds only.
        return jnp.sum(v.reshape(-1, 8, LANE), axis=0)

    out_ref[0, :, :] += fold(p)
    out_ref[1, :, :] += fold(m)
    out_ref[2, :, :] += fold(p * m)
    out_ref[3, :, :] += fold(loss)


def focal_dice_iou_loss(pred, mask, pred_iou, weight=_WEIGHT, iou_scale=_IOU_SCALE):
    """pred, mask: [B, 1, H, W] (any float dtype); pred_iou: [B, 1]. Returns scalar f32."""
    assert pred.shape == mask.shape, "pred and mask should have the same shape."
    n = int(pred.size)

    # --- tiling --------------------------------------------------------------
    rows = -(-n // LANE)
    num_slices = 2                       # leading parallel axis (2 TCs on v7x megacore)
    rows_per_slice = -(-rows // num_slices)
    if rows_per_slice <= _MAX_ROW_TILE:
        tr = max(16, ((rows_per_slice + 15) // 16) * 16)   # x16 for bf16 sublane packing
        steps = 1
    else:
        tr = _MAX_ROW_TILE
        steps = -(-rows_per_slice // tr)
    rows_padded = num_slices * steps * tr
    padded_n = rows_padded * LANE

    # --- layout: flatten to a lane-dense [rows_padded, 128] slab --------------
    # No dtype cast here (kernel casts in-register).  Padding only materializes a
    # copy when n is not already tile-aligned.
    def to_slab(x, pad_val):
        flat = x.reshape(-1)
        if padded_n > n:
            flat = jnp.pad(flat, (0, padded_n - n), constant_values=pad_val)
        return flat.reshape(rows_padded, LANE)

    pred2d = to_slab(pred, _PAD_LOGIT)
    mask2d = to_slab(mask, 0.0)

    in_map = lambda p_idx, j: (p_idx * steps + j, 0)

    partials = pl.pallas_call(
        _partials_kernel,
        out_shape=jax.ShapeDtypeStruct(
            (num_slices * _NUM_PARTIALS, 8, LANE), jnp.float32),
        grid_spec=pltpu.PrefetchScalarGridSpec(
            num_scalar_prefetch=0,
            grid=(num_slices, steps),
            in_specs=[
                pl.BlockSpec((tr, LANE), in_map),   # pred tile (native dtype)
                pl.BlockSpec((tr, LANE), in_map),   # mask tile (native dtype)
            ],
            out_specs=pl.BlockSpec((_NUM_PARTIALS, 8, LANE),
                                   lambda p_idx, j: (p_idx, 0, 0)),
        ),
        compiler_params=pltpu.CompilerParams(
            dimension_semantics=("parallel", "arbitrary"),
        ),
    )(pred2d, mask2d)

    # --- tiny finalization in plain JAX (cross-slice + cross-lane reduce) -----
    sums = jnp.sum(partials.reshape(num_slices, _NUM_PARTIALS, 8, LANE),
                   axis=(0, 2, 3))
    sum_p, sum_m, sum_pm, sum_loss = sums[0], sums[1], sums[2], sums[3]

    # FocalLoss: num_pos + num_neg == numel (original, unpadded)
    focal = sum_loss / (float(n) + 1e-12)
    # DiceLoss
    dice = 1.0 - (2.0 * sum_pm + _SMOOTH) / (sum_p + sum_m + _SMOOTH)
    # MaskIoULoss
    union = sum_p + sum_m - sum_pm
    iou_v = (sum_pm + 1e-07) / (union + 1e-07)
    iou_loss = jnp.mean((iou_v - pred_iou.astype(jnp.float32)) ** 2)

    return weight * focal + dice + iou_scale * iou_loss


def _reference_loss(pred, mask, pred_iou, weight=_WEIGHT, iou_scale=_IOU_SCALE):
    """Pure-JAX mirror of the PyTorch forward (for validation)."""
    p = jax.nn.sigmoid(pred.astype(jnp.float32))
    m = mask.astype(jnp.float32)
    numel = float(pred.size)
    num_pos = jnp.sum(m)
    num_neg = numel - num_pos
    loss_pos = -_ALPHA * m * (1.0 - p) ** 2 * jnp.log(p + 1e-12)
    loss_neg = -(1.0 - _ALPHA) * (1.0 - m) * p ** 2 * jnp.log(1.0 - p + 1e-12)
    focal = (jnp.sum(loss_pos) + jnp.sum(loss_neg)) / (num_pos + num_neg + 1e-12)
    inter = jnp.sum(p * m)
    union = jnp.sum(p) + jnp.sum(m)
    dice = 1.0 - (2.0 * inter + _SMOOTH) / (union + _SMOOTH)
    union_i = union - inter
    iou_v = (inter + 1e-07) / (union_i + 1e-07)
    iou_loss = jnp.mean((iou_v - pred_iou.astype(jnp.float32)) ** 2)
    return weight * focal + dice + iou_scale * iou_loss


if __name__ == "__main__":
    key = jax.random.PRNGKey(0)
    k1, k2, k3 = jax.random.split(key, 3)

    B, C, H, W = 2, 1, 16, 16
    pred = jax.random.normal(k1, (B, C, H, W), dtype=jnp.float32)            # logits
    mask = jax.random.bernoulli(k2, 0.3, (B, C, H, W)).astype(jnp.float32)   # binary mask
    pred_iou = jax.random.uniform(k3, (B, 1), dtype=jnp.float32)

    loss = jax.block_until_ready(focal_dice_iou_loss(pred, mask, pred_iou))
    ref = jax.block_until_ready(_reference_loss(pred, mask, pred_iou))
    assert jnp.allclose(loss, ref, rtol=1e-4, atol=1e-5), (loss, ref)

    print("KERNEL_OK")
</pallas_src>

<mosaic_0001>
module attributes {stable_mosaic.version = 11 : i64} {
  func.func @_partials_kernel(%arg0: i32, %arg1: i32, %arg2: memref<16x128xf32, #tpu.memory_space<vmem>>, %arg3: memref<16x128xf32, #tpu.memory_space<vmem>>, %arg4: memref<4x8x128xf32, #tpu.memory_space<vmem>>) attributes {dimension_semantics = [#tpu.dimension_semantics<parallel>, #tpu.dimension_semantics<arbitrary>], iteration_bounds = array<i64: 2, 1>, scalar_prefetch = 0 : i64, scratch_operands = 0 : i64, tpu.core_type = #tpu.core_type<tc>, window_params = [{transform_indices = @transform_0, window_bounds = array<i64: 16, 128>}, {transform_indices = @transform_1, window_bounds = array<i64: 16, 128>}, {transform_indices = @transform_2, window_bounds = array<i64: 4, 8, 128>}]} {
    %c0_i32 = arith.constant 0 : i32
    %0 = arith.cmpi eq, %arg1, %c0_i32 : i32
    %1 = arith.extui %0 : i1 to i32
    %c0_i32_0 = arith.constant 0 : i32
    %2 = arith.cmpi ne, %1, %c0_i32_0 : i32
    scf.if %2 {
      %cst_42 = arith.constant 0.000000e+00 : f32
      %80 = vector.broadcast %cst_42 : f32 to vector<4x8x128xf32>
      %c0_43 = arith.constant 0 : index
      %c0_44 = arith.constant 0 : index
      %c0_45 = arith.constant 0 : index
      %81 = vector.load %arg4[%c0_43, %c0_44, %c0_45] : memref<4x8x128xf32, #tpu.memory_space<vmem>>, vector<4x8x128xf32>
      tpu.vector_store %arg4[%c0_43, %c0_44, %c0_45], %80 {strides = array<i32>} : memref<4x8x128xf32, #tpu.memory_space<vmem>>, vector<4x8x128xf32>,
    } else {
    }
    %c0 = arith.constant 0 : index
    %c0_1 = arith.constant 0 : index
    %3 = vector.load %arg2[%c0, %c0_1] : memref<16x128xf32, #tpu.memory_space<vmem>>, vector<16x128xf32>
    %c0_2 = arith.constant 0 : index
    %c0_3 = arith.constant 0 : index
    %4 = vector.load %arg3[%c0_2, %c0_3] : memref<16x128xf32, #tpu.memory_space<vmem>>, vector<16x128xf32>
    %5 = math.absf %3 : vector<16x128xf32>
    %cst = arith.constant 0.000000e+00 : f32
    %6 = vector.broadcast %cst : f32 to vector<16x128xf32>
    %7 = arith.subf %6, %5 : vector<16x128xf32>
    %8 = math.exp %7 : vector<16x128xf32>
    %cst_4 = arith.constant 1.000000e+00 : f32
    %9 = vector.broadcast %cst_4 : f32 to vector<16x128xf32>
    %10 = arith.addf %9, %8 : vector<16x128xf32>
    %11 = math.log %10 : vector<16x128xf32>
    %cst_5 = arith.constant 0.000000e+00 : f32
    %12 = vector.broadcast %cst_5 : f32 to vector<16x128xf32>
    %13 = arith.subf %12, %3 : vector<16x128xf32>
    %cst_6 = arith.constant 0.000000e+00 : f32
    %14 = vector.broadcast %cst_6 : f32 to vector<16x128xf32>
    %15 = arith.maximumf %13, %14 : vector<16x128xf32>
    %16 = arith.addf %15, %11 : vector<16x128xf32>
    %cst_7 = arith.constant 0.000000e+00 : f32
    %17 = vector.broadcast %cst_7 : f32 to vector<16x128xf32>
    %18 = arith.subf %17, %16 : vector<16x128xf32>
    %cst_8 = arith.constant 0.000000e+00 : f32
    %19 = vector.broadcast %cst_8 : f32 to vector<16x128xf32>
    %20 = arith.maximumf %3, %19 : vector<16x128xf32>
    %21 = arith.addf %20, %11 : vector<16x128xf32>
    %cst_9 = arith.constant 0.000000e+00 : f32
    %22 = vector.broadcast %cst_9 : f32 to vector<16x128xf32>
    %23 = arith.subf %22, %21 : vector<16x128xf32>
    %cst_10 = arith.constant 1.000000e+00 : f32
    %24 = vector.broadcast %cst_10 : f32 to vector<16x128xf32>
    %25 = arith.addf %24, %8 : vector<16x128xf32>
    %cst_11 = arith.constant 1.000000e+00 : f32
    %26 = vector.broadcast %cst_11 : f32 to vector<16x128xf32>
    %27 = arith.divf %26, %25 : vector<16x128xf32>
    %cst_12 = arith.constant 0.000000e+00 : f32
    %28 = vector.broadcast %cst_12 : f32 to vector<16x128xf32>
    %29 = arith.cmpf oge, %3, %28 : vector<16x128xf32>
    %30 = arith.mulf %8, %27 : vector<16x128xf32>
    %31 = arith.select %29, %27, %30 : vector<16x128xi1>, vector<16x128xf32>
    %cst_13 = arith.constant 1.000000e+00 : f32
    %32 = vector.broadcast %cst_13 : f32 to vector<16x128xf32>
    %33 = arith.subf %32, %31 : vector<16x128xf32>
    %cst_14 = arith.constant -2.500000e-01 : f32
    %34 = vector.broadcast %cst_14 : f32 to vector<16x128xf32>
    %35 = arith.mulf %34, %4 : vector<16x128xf32>
    %36 = arith.mulf %33, %33 : vector<16x128xf32>
    %37 = arith.mulf %35, %36 : vector<16x128xf32>
    %38 = arith.mulf %37, %18 : vector<16x128xf32>
    %cst_15 = arith.constant 1.000000e+00 : f32
    %39 = vector.broadcast %cst_15 : f32 to vector<16x128xf32>
    %40 = arith.subf %39, %4 : vector<16x128xf32>
    %cst_16 = arith.constant -7.500000e-01 : f32
    %41 = vector.broadcast %cst_16 : f32 to vector<16x128xf32>
    %42 = arith.mulf %41, %40 : vector<16x128xf32>
    %43 = arith.mulf %31, %31 : vector<16x128xf32>
    %44 = arith.mulf %42, %43 : vector<16x128xf32>
    %45 = arith.mulf %44, %23 : vector<16x128xf32>
    %46 = arith.addf %38, %45 : vector<16x128xf32>
    %c0_17 = arith.constant 0 : index
    %c0_18 = arith.constant 0 : index
    %c0_19 = arith.constant 0 : index
    %47 = vector.load %arg4[%c0_17, %c0_18, %c0_19] : memref<4x8x128xf32, #tpu.memory_space<vmem>>, vector<1x8x128xf32>
    %48 = vector.shape_cast %47 : vector<1x8x128xf32> to vector<8x128xf32>
    %49 = vector.shape_cast %31 : vector<16x128xf32> to vector<2x8x128xf32>
    %cst_20 = arith.constant dense<0.000000e+00> : vector<8x128xf32>
    %50 = vector.multi_reduction <add>, %49, %cst_20 [0] : vector<2x8x128xf32> to vector<8x128xf32>
    %51 = arith.addf %48, %50 : vector<8x128xf32>
    %c0_21 = arith.constant 0 : index
    %c0_22 = arith.constant 0 : index
    %c0_23 = arith.constant 0 : index
    %52 = vector.load %arg4[%c0_21, %c0_22, %c0_23] : memref<4x8x128xf32, #tpu.memory_space<vmem>>, vector<1x8x128xf32>
    %53 = vector.shape_cast %52 : vector<1x8x128xf32> to vector<8x128xf32>
    %54 = vector.shape_cast %51 : vector<8x128xf32> to vector<1x8x128xf32>
    tpu.vector_store %arg4[%c0_21, %c0_22, %c0_23], %54 {strides = array<i32>} : memref<4x8x128xf32, #tpu.memory_space<vmem>>, vector<1x8x128xf32>,
    %c1 = arith.constant 1 : index
    %c0_24 = arith.constant 0 : index
    %c0_25 = arith.constant 0 : index
    %55 = vector.load %arg4[%c1, %c0_24, %c0_25] : memref<4x8x128xf32, #tpu.memory_space<vmem>>, vector<1x8x128xf32>
    %56 = vector.shape_cast %55 : vector<1x8x128xf32> to vector<8x128xf32>
    %57 = vector.shape_cast %4 : vector<16x128xf32> to vector<2x8x128xf32>
    %cst_26 = arith.constant dense<0.000000e+00> : vector<8x128xf32>
    %58 = vector.multi_reduction <add>, %57, %cst_26 [0] : vector<2x8x128xf32> to vector<8x128xf32>
    %59 = arith.addf %56, %58 : vector<8x128xf32>
    %c1_27 = arith.constant 1 : index
    %c0_28 = arith.constant 0 : index
    %c0_29 = arith.constant 0 : index
    %60 = vector.load %arg4[%c1_27, %c0_28, %c0_29] : memref<4x8x128xf32, #tpu.memory_space<vmem>>, vector<1x8x128xf32>
    %61 = vector.shape_cast %60 : vector<1x8x128xf32> to vector<8x128xf32>
    %62 = vector.shape_cast %59 : vector<8x128xf32> to vector<1x8x128xf32>
    tpu.vector_store %arg4[%c1_27, %c0_28, %c0_29], %62 {strides = array<i32>} : memref<4x8x128xf32, #tpu.memory_space<vmem>>, vector<1x8x128xf32>,
    %c2 = arith.constant 2 : index
    %c0_30 = arith.constant 0 : index
    %c0_31 = arith.constant 0 : index
    %63 = vector.load %arg4[%c2, %c0_30, %c0_31] : memref<4x8x128xf32, #tpu.memory_space<vmem>>, vector<1x8x128xf32>
    %64 = vector.shape_cast %63 : vector<1x8x128xf32> to vector<8x128xf32>
    %65 = arith.mulf %31, %4 : vector<16x128xf32>
    %66 = vector.shape_cast %65 : vector<16x128xf32> to vector<2x8x128xf32>
    %cst_32 = arith.constant dense<0.000000e+00> : vector<8x128xf32>
    %67 = vector.multi_reduction <add>, %66, %cst_32 [0] : vector<2x8x128xf32> to vector<8x128xf32>
    %68 = arith.addf %64, %67 : vector<8x128xf32>
    %c2_33 = arith.constant 2 : index
    %c0_34 = arith.constant 0 : index
    %c0_35 = arith.constant 0 : index
    %69 = vector.load %arg4[%c2_33, %c0_34, %c0_35] : memref<4x8x128xf32, #tpu.memory_space<vmem>>, vector<1x8x128xf32>
    %70 = vector.shape_cast %69 : vector<1x8x128xf32> to vector<8x128xf32>
    %71 = vector.shape_cast %68 : vector<8x128xf32> to vector<1x8x128xf32>
    tpu.vector_store %arg4[%c2_33, %c0_34, %c0_35], %71 {strides = array<i32>} : memref<4x8x128xf32, #tpu.memory_space<vmem>>, vector<1x8x128xf32>,
    %c3 = arith.constant 3 : index
    %c0_36 = arith.constant 0 : index
    %c0_37 = arith.constant 0 : index
    %72 = vector.load %arg4[%c3, %c0_36, %c0_37] : memref<4x8x128xf32, #tpu.memory_space<vmem>>, vector<1x8x128xf32>
    %73 = vector.shape_cast %72 : vector<1x8x128xf32> to vector<8x128xf32>
    %74 = vector.shape_cast %46 : vector<16x128xf32> to vector<2x8x128xf32>
    %cst_38 = arith.constant dense<0.000000e+00> : vector<8x128xf32>
    %75 = vector.multi_reduction <add>, %74, %cst_38 [0] : vector<2x8x128xf32> to vector<8x128xf32>
    %76 = arith.addf %73, %75 : vector<8x128xf32>
    %c3_39 = arith.constant 3 : index
    %c0_40 = arith.constant 0 : index
    %c0_41 = arith.constant 0 : index
    %77 = vector.load %arg4[%c3_39, %c0_40, %c0_41] : memref<4x8x128xf32, #tpu.memory_space<vmem>>, vector<1x8x128xf32>
    %78 = vector.shape_cast %77 : vector<1x8x128xf32> to vector<8x128xf32>
    %79 = vector.shape_cast %76 : vector<8x128xf32> to vector<1x8x128xf32>
    tpu.vector_store %arg4[%c3_39, %c0_40, %c0_41], %79 {strides = array<i32>} : memref<4x8x128xf32, #tpu.memory_space<vmem>>, vector<1x8x128xf32>,
    return
  }
  func.func @transform_0(%arg0: i32, %arg1: i32) -> (i32, i32) {
    %c1_i32 = arith.constant 1 : i32
    %0 = arith.muli %arg0, %c1_i32 : i32
    %1 = arith.addi %0, %arg1 : i32
    %c0_i32 = arith.constant 0 : i32
    %c0_i32_0 = arith.constant 0 : i32
    return %1, %c0_i32 : i32, i32
  }
  func.func @transform_1(%arg0: i32, %arg1: i32) -> (i32, i32) {
    %c1_i32 = arith.constant 1 : i32
    %0 = arith.muli %arg0, %c1_i32 : i32
    %1 = arith.addi %0, %arg1 : i32
    %c0_i32 = arith.constant 0 : i32
    %c0_i32_0 = arith.constant 0 : i32
    return %1, %c0_i32 : i32, i32
  }
  func.func @transform_2(%arg0: i32, %arg1: i32) -> (i32, i32, i32) {
    %c0_i32 = arith.constant 0 : i32
    %c0_i32_0 = arith.constant 0 : i32
    %c0_i32_1 = arith.constant 0 : i32
    return %arg0, %c0_i32, %c0_i32_0 : i32, i32, i32
  }
}

</mosaic_0001>

<llo_original>
// kernel: tpu_custom_call.1
$region0: #{tpu_custom_call.1}
  #allocation0 [shape = 'u32[]', space=smem, size = 0x4, offset = 0x4, fixed_abs, tag = 'smem constant byte address 0x4 - core index']
  #allocation1 [shape = 'u32[72,128]{1,0:T(1,128)}', space=vmem, size = 0x9000, scoped, tag = 'internal scratch']
  %s0 = inlined_call_operand.hbm [shape: f32[32,128], index: 0, kind: input, shape index: {}]
  %s1 = inlined_call_operand.hbm [shape: f32[32,128], index: 1, kind: input, shape index: {}]
  %s2 = inlined_call_operand.hbm [shape: f32[8,8,128], index: 2, kind: output, shape index: {}]
  %s3 = sld [smem:[#allocation0]]
  $region53: #{tpu_custom_call.1} parent=0
    _
  %s5 = ssub.s32 1, %s3
  %s6 = scalar_select 0, %s5, %s3
  $region1: #{tpu_custom_call.1} parent=0
    #allocation2 [shape = 'u8[16384]{0}', space=vmem, size = 0x4000, scoped, tag = 'input window, operand 0']
    #allocation3 [shape = 's32[2]{0}', space=sflag, size = 0x8, scoped, tag = 'scoped memory for tpu_custom_call.1']
    #allocation4 [shape = 's32[2]{0}', space=sflag, size = 0x8, scoped, tag = 'scoped memory for tpu_custom_call.1']
    #allocation5 [shape = 'u8[16384]{0}', space=vmem, size = 0x4000, scoped, tag = 'input window, operand 1']
    #allocation6 [shape = 's32[2]{0}', space=sflag, size = 0x8, scoped, tag = 'scoped memory for tpu_custom_call.1']
    #allocation7 [shape = 'u8[32768]{0}', space=vmem, size = 0x8000, scoped, tag = 'output window, operand 0']
    %7 = vsyncpa [#allocation3], 0
    %s8 = scalar_lea.sflag [#allocation3], 1
    %9 = vsyncpa %s8, 0
    %10 = vsyncpa [#allocation6], 0
    %s11 = scalar_lea.sflag [#allocation6], 1
    %12 = vsyncpa %s11, 0
    %13 = vsyncpa [#allocation4], 0
    %s14 = scalar_lea.sflag [#allocation4], 1
    %15 = vsyncpa %s14, 0
    loop: start=0, step=1, limit=4
    $region2: #{tpu_custom_call.1} parent=1 // loop_pre_header
      _
    $region3: #{tpu_custom_call.1} parent=1 // loop_header
      %s17 = sphi 0, %s21
      %p18 = scmp.ge.s32.totalorder %s17, 4
      %s24 = sphi 0, %s36
      %s25 = sphi 0, %s32
      %s26 = sphi 0, %s24
      %s27 = sphi 0, %s25
      %s28 = sphi 0, %s26
      %s29 = sphi 0, %s27
      %s41 = sphi 0, %s43
      %s44 = sphi 0, %s41
      %s45 = sphi 0, %s44
      %s61 = sphi 0, %s45
      %s69 = sphi 0, %s71
      %s72 = sphi 0, %s69
      %s73 = sphi 0, %s72
      %s89 = sphi 0, %s73
      %s95 = sphi 0, %s97
      %s98 = sphi 0, %s95
      %s99 = sphi 0, %s98
      %s115 = sphi 0, %s99
    $region4: #{tpu_custom_call.1} parent=1 // loop_header_branch
      %20 = sbr.rel (%p18) target = $region8
    $region5: #{tpu_custom_call.1} parent=1 // loop_body
      %s22 = ssub.s32 %s17, 1
      %s23 = ssub.s32 %s17, 2
      %s30 = sadd.s32 1, %s25
      %p31 = scmp.ge.s32.totalorder %s30, 1
      %s32 = scalar_select %p31, 0, %s30
      %s33 = sadd.s32 1, %s24
      %s34 = scalar_select %p31, %s33, %s24
      %p35 = scmp.ge.s32.totalorder %s34, 2
      %s36 = scalar_select %p35, 0, %s34
      %s37 = sadd.s32 %s24, %s25
      %s38 = sadd.s32 %s36, %s32
      %s39 = ssub.s32 %s37, %s38
      %p40 = scmp.eq.s32.totalorder %s39, 0
      %s42 = sadd.s32 %s41, 1
      %s43 = scalar_select %p40, %s41, %s42
      %p46 = pneg %p40
      %p47 = scmp.eq.s32.totalorder %s17, 1
      %p48 = por %p46, %p47
      %p49 = scmp.ne.s32.totalorder %s41, %s44
      %p50 = scmp.eq.s32.totalorder %s17, 0
      %p51 = por %p49, %p50
      %p52 = scmp.ne.s32.totalorder %s41, %s44
      %p53 = scmp.eq.s32.totalorder %s22, 1
      %p54 = por %p52, %p53
      %p55 = scmp.ne.s32.totalorder %s44, %s45
      %p56 = scmp.eq.s32.totalorder %s22, 0
      %p57 = por %p55, %p56
      %p58 = scmp.ne.s32.totalorder %s44, %s45
      %p59 = scmp.eq.s32.totalorder %s23, 1
      %p60 = por %p58, %p59
      %p62 = scmp.ne.s32.totalorder %s45, %s61
      %p63 = scmp.eq.s32.totalorder %s23, 0
      %p64 = por %p62, %p63
      %s65 = sadd.s32 %s24, %s25
      %s66 = sadd.s32 %s36, %s32
      %s67 = ssub.s32 %s65, %s66
      %p68 = scmp.eq.s32.totalorder %s67, 0
      %s70 = sadd.s32 %s69, 1
      %s71 = scalar_select %p68, %s69, %s70
      %p74 = pneg %p68
      %p75 = scmp.eq.s32.totalorder %s17, 1
      %p76 = por %p74, %p75
      %p77 = scmp.ne.s32.totalorder %s69, %s72
      %p78 = scmp.eq.s32.totalorder %s17, 0
      %p79 = por %p77, %p78
      %p80 = scmp.ne.s32.totalorder %s69, %s72
      %p81 = scmp.eq.s32.totalorder %s22, 1
      %p82 = por %p80, %p81
      %p83 = scmp.ne.s32.totalorder %s72, %s73
      %p84 = scmp.eq.s32.totalorder %s22, 0
      %p85 = por %p83, %p84
      %p86 = scmp.ne.s32.totalorder %s72, %s73
      %p87 = scmp.eq.s32.totalorder %s23, 1
      %p88 = por %p86, %p87
      %p90 = scmp.ne.s32.totalorder %s73, %s89
      %p91 = scmp.eq.s32.totalorder %s23, 0
      %p92 = por %p90, %p91
      %s93 = ssub.s32 %s24, %s36
      %p94 = scmp.eq.s32.totalorder %s93, 0
      %s96 = sadd.s32 %s95, 1
      %s97 = scalar_select %p94, %s95, %s96
      %p100 = pneg %p94
      %p101 = scmp.eq.s32.totalorder %s17, 1
      %p102 = por %p100, %p101
      %p103 = scmp.ne.s32.totalorder %s95, %s98
      %p104 = scmp.eq.s32.totalorder %s17, 0
      %p105 = por %p103, %p104
      %p106 = scmp.ne.s32.totalorder %s95, %s98
      %p107 = scmp.eq.s32.totalorder %s22, 1
      %p108 = por %p106, %p107
      %p109 = scmp.ne.s32.totalorder %s98, %s99
      %p110 = scmp.eq.s32.totalorder %s22, 0
      %p111 = por %p109, %p110
      %p112 = scmp.ne.s32.totalorder %s98, %s99
      %p113 = scmp.eq.s32.totalorder %s23, 1
      %p114 = por %p112, %p113
      %p116 = scmp.ne.s32.totalorder %s99, %s115
      %p117 = scmp.eq.s32.totalorder %s23, 0
      %p118 = por %p116, %p117
      %p119 = scmp.le.s32.totalorder 1, %s17
      %p120 = scmp.lt.s32.totalorder %s17, 3
      %p121 = pnand %p119, %p120
      %p122 = pneg %p121
      // Predicated region
      $region9: #{tpu_custom_call.1} parent=5 // pred_check
        _
      $region10: #{tpu_custom_call.1} parent=5 // pred_check_branch
        %124 = sbr.rel (%p121) target = $region12
      $region11: #{tpu_custom_call.1} parent=5 // pred_region
        %s125 = ssub.s32 %s17, 1
      $region12: #{tpu_custom_call.1} parent=5 // pred_fallthru
        _
      %p126 = scmp.lt.s32.totalorder %s17, 2
      // Predicated region
      $region13: #{tpu_custom_call.1} parent=5 // pred_check
        %p127 = pneg %p126
      $region14: #{tpu_custom_call.1} parent=5 // pred_check_branch
        %129 = sbr.rel (%p127) target = $region16
      $region15: #{tpu_custom_call.1} parent=5 // pred_region
        // Predicated region
        $region17: #{tpu_custom_call.1} parent=15 // pred_check
          %p130 = pneg %p51
        $region18: #{tpu_custom_call.1} parent=15 // pred_check_branch
          %132 = sbr.rel (%p130) target = $region20
        $region19: #{tpu_custom_call.1} parent=15 // pred_region
          %s133 = sand.u32 %s41, 1
          %s134 = scalar_lea.sflag [#allocation3], %s133
          %s135 = sand.u32 %s41, 1
          %s136 = smul.addr %s135, 16
          %s137 = scalar_lea.vmem [#allocation2], %s136
          %s138 = sadd.s32 %s24, %s25
          %s139 = smul.u32 2, %s138
          %141 = vsyncadd %s134, 0
          %s142 = smul.addr %s139, 8
          %s143 = scalar_lea.hbm %s0, %s142
          %s144 = sshll.u32 %s143, 4
          %s145 = int_to_ptr.hbm [resolvable:$true] %s144
          %s146 = sshll.u32 %s137, 4
          %s147 = int_to_ptr.vmem [resolvable:$true] %s146
          %152 = dma.hbm_to_vmem [thread:$0]  %s145, 256, %s147, %s134, 128, 128, 8
        $region20: #{tpu_custom_call.1} parent=15 // pred_fallthru
          _
        // Predicated region
        $region21: #{tpu_custom_call.1} parent=15 // pred_check
          %p153 = pneg %p79
        $region22: #{tpu_custom_call.1} parent=15 // pred_check_branch
          %155 = sbr.rel (%p153) target = $region24
        $region23: #{tpu_custom_call.1} parent=15 // pred_region
          %s156 = sand.u32 %s69, 1
          %s157 = scalar_lea.sflag [#allocation6], %s156
          %s158 = sand.u32 %s69, 1
          %s159 = smul.addr %s158, 16
          %s160 = scalar_lea.vmem [#allocation5], %s159
          %s161 = sadd.s32 %s24, %s25
          %s162 = smul.u32 2, %s161
          %164 = vsyncadd %s157, 0
          %s165 = smul.addr %s162, 8
          %s166 = scalar_lea.hbm %s1, %s165
          %s167 = sshll.u32 %s166, 4
          %s168 = int_to_ptr.hbm [resolvable:$true] %s167
          %s169 = sshll.u32 %s160, 4
          %s170 = int_to_ptr.vmem [resolvable:$true] %s169
          %175 = dma.hbm_to_vmem [thread:$0]  %s168, 256, %s170, %s157, 128, 128, 8
        $region24: #{tpu_custom_call.1} parent=15 // pred_fallthru
          _
      $region16: #{tpu_custom_call.1} parent=5 // pred_fallthru
        _
      %p176 = scmp.le.s32.totalorder 1, %s17
      %p177 = scmp.lt.s32.totalorder %s17, 3
      %p178 = pnand %p176, %p177
      %p179 = pneg %p178
      // Predicated region
      $region25: #{tpu_custom_call.1} parent=5 // pred_check
        _
      $region26: #{tpu_custom_call.1} parent=5 // pred_check_branch
        %181 = sbr.rel (%p178) target = $region28
      $region27: #{tpu_custom_call.1} parent=5 // pred_region
        %s182 = ssub.s32 %s17, 1
        %s183 = sand.u32 %s44, 1
        %s184 = scalar_lea.sflag [#allocation3], %s183
        %s185 = sand.u32 %s44, 1
        %s186 = smul.addr %s185, 16
        %s187 = scalar_lea.vmem [#allocation2], %s186
        // Predicated region
        $region29: #{tpu_custom_call.1} parent=27 // pred_check
          %p188 = pneg %p57
        $region30: #{tpu_custom_call.1} parent=27 // pred_check_branch
          %190 = sbr.rel (%p188) target = $region32
        $region31: #{tpu_custom_call.1} parent=27 // pred_region
          %192 = dma.done %s184, 256
        $region32: #{tpu_custom_call.1} parent=27 // pred_fallthru
          _
        %s193 = sand.u32 %s72, 1
        %s194 = scalar_lea.sflag [#allocation6], %s193
        %s195 = sand.u32 %s72, 1
        %s196 = smul.addr %s195, 16
        %s197 = scalar_lea.vmem [#allocation5], %s196
        // Predicated region
        $region33: #{tpu_custom_call.1} parent=27 // pred_check
          %p198 = pneg %p85
        $region34: #{tpu_custom_call.1} parent=27 // pred_check_branch
          %200 = sbr.rel (%p198) target = $region36
        $region35: #{tpu_custom_call.1} parent=27 // pred_region
          %202 = dma.done %s194, 256
        $region36: #{tpu_custom_call.1} parent=27 // pred_fallthru
          _
        %s203 = sand.u32 %s44, 1
        %s204 = scalar_lea.sflag [#allocation3], %s203
        %s205 = sand.u32 %s44, 1
        %s206 = smul.addr %s205, 16
        %s207 = scalar_lea.vmem [#allocation2], %s206
        %p208 = pneg %p57
        %p209 = pneg %p54
        %s210 = sand.u32 %s72, 1
        %s211 = scalar_lea.sflag [#allocation6], %s210
        %s212 = sand.u32 %s72, 1
        %s213 = smul.addr %s212, 16
        %s214 = scalar_lea.vmem [#allocation5], %s213
        %p215 = pneg %p85
        %p216 = pneg %p82
        %p217 = pneg %p111
        %p218 = pneg %p108
        %s219 = sand.u32 %s98, 1
        %s220 = scalar_lea.sflag [#allocation4], %s219
        %s221 = sand.u32 %s98, 1
        %s222 = smul.addr %s221, 32
        %s223 = scalar_lea.vmem [#allocation7], %s222
        %s224 = sadd.s32 %s26, %s27
        %s225 = smul.u32 2, %s224
        %s226 = sadd.s32 %s26, %s27
        %s227 = smul.u32 2, %s226
        %s228 = smul.u32 4, %s26
        %p229 = scmp.eq.s32.totalorder %s27, 0
        // Predicated region
        $region37: #{tpu_custom_call.1} parent=27 // pred_check
          %p230 = pneg %p229
        $region38: #{tpu_custom_call.1} parent=27 // pred_check_branch
          %232 = sbr.rel (%p230) target = $region40
        $region39: #{tpu_custom_call.1} parent=27 // pred_region
          %233 = vst [vmem:[%s223] sm:$0xff] 0.0
          %234 = vst [vmem:[%s223 + $0x8] sm:$0xff] 0.0
          %235 = vst [vmem:[%s223 + $0x10] sm:$0xff] 0.0
          %236 = vst [vmem:[%s223 + $0x18] sm:$0xff] 0.0
        $region40: #{tpu_custom_call.1} parent=27 // pred_fallthru
          _
        %v237 = vld [vmem:[%s187] sm:$0xff]
        %v238 = vld [vmem:[%s187 + $0x8] sm:$0xff]
        %v239 = vld [vmem:[%s197] sm:$0xff]
        %v240 = vld [vmem:[%s197 + $0x8] sm:$0xff]
        %v241 = vand.u32 2147483647, %v237
        %v242 = vand.u32 2147483647, %v238
        %v243 = vsub.f32 0.0, %v241
        %v244 = vsub.f32 0.0, %v242
        %v245 = vmul.f32 %v243, 1.442695
        %v246 = vpow.pop %v245
        %v247 = vmul.f32 %v244, 1.442695
        %v248 = vpow.pop %v247
        %v249 = vadd.f32 %v246, 1.0
        %v250 = vadd.f32 %v248, 1.0
        %v251 = vlog2.pop %v249
        %v252 = vmul.f32 %v251, 0.6931472
        %v253 = vlog2.pop %v250
        %v254 = vmul.f32 %v253, 0.6931472
        %v255 = vsub.f32 0.0, %v237
        %v256 = vsub.f32 0.0, %v238
        %v257 = vmax.f32 %v255, 0.0
        %v258 = vmax.f32 %v256, 0.0
        %v259 = vadd.f32 %v257, %v252
        %v260 = vadd.f32 %v258, %v254
        %v261 = vsub.f32 0.0, %v259
        %v262 = vsub.f32 0.0, %v260
        %v263 = vmax.f32 %v237, 0.0
        %v264 = vmax.f32 %v238, 0.0
        %v265 = vadd.f32 %v263, %v252
        %v266 = vadd.f32 %v264, %v254
        %v267 = vsub.f32 0.0, %v265
        %v268 = vsub.f32 0.0, %v266
        %v269 = vrcp.pop %v249
        %v270 = vmul.f32 %v249, %v269
        %v271 = vsub.f32 1.0, %v270
        %v272 = vmul.f32 %v269, %v271
        %v273 = vadd.f32 %v269, %v272
        %vm274 = vweird.f32 %v249
        %vm275 = vweird.f32 %v269
        %vm276 = vmor %vm274, %vm275
        %v277 = vsel %vm276, %v269, %v273
        %v278 = vand.u32 2147483647, %v249
        %vm279 = vcmp.eq.f32.partialorder %v278, 8.507059e+37
        %v280 = vand.u32 %v249, 2147483648
        %v281 = vor.u32 1.1754944e-38, %v280
        %v282 = vsel %vm279, %v281, %v277
        %v283 = vmul.f32 1.0, %v282
        %v284 = vrcp.pop %v250
        %v285 = vmul.f32 %v250, %v284
        %v286 = vsub.f32 1.0, %v285
        %v287 = vmul.f32 %v284, %v286
        %v288 = vadd.f32 %v284, %v287
        %vm289 = vweird.f32 %v250
        %vm290 = vweird.f32 %v284
        %vm291 = vmor %vm289, %vm290
        %v292 = vsel %vm291, %v284, %v288
        %v293 = vand.u32 2147483647, %v250
        %vm294 = vcmp.eq.f32.partialorder %v293, 8.507059e+37
        %v295 = vand.u32 %v250, 2147483648
        %v296 = vor.u32 1.1754944e-38, %v295
        %v297 = vsel %vm294, %v296, %v292
        %v298 = vmul.f32 1.0, %v297
        %vm299 = vcmp.ge.f32.partialorder %v237, 0.0
        %vm300 = vcmp.ge.f32.partialorder %v238, 0.0
        %v301 = vmul.f32 %v246, %v283
        %v302 = vmul.f32 %v248, %v298
        %v303 = vsel %vm299, %v283, %v301
        %v304 = vsel %vm300, %v298, %v302
        %v305 = vsub.f32 1.0, %v303
        %v306 = vsub.f32 1.0, %v304
        %v307 = vmul.f32 %v239, -0.25
        %v308 = vmul.f32 %v240, -0.25
        %v309 = vmul.f32 %v305, %v305
        %v310 = vmul.f32 %v306, %v306
        %v311 = vmul.f32 %v307, %v309
        %v312 = vmul.f32 %v308, %v310
        %v313 = vmul.f32 %v311, %v261
        %v314 = vmul.f32 %v312, %v262
        %v315 = vsub.f32 1.0, %v239
        %v316 = vsub.f32 1.0, %v240
        %v317 = vmul.f32 %v315, -0.75
        %v318 = vmul.f32 %v316, -0.75
        %v319 = vmul.f32 %v303, %v303
        %v320 = vmul.f32 %v304, %v304
        %v321 = vmul.f32 %v317, %v319
        %v322 = vmul.f32 %v318, %v320
        %v323 = vmul.f32 %v321, %v267
        %v324 = vmul.f32 %v322, %v268
        %v325 = vadd.f32 %v313, %v323
        %v326 = vadd.f32 %v314, %v324
        %v327 = vld [vmem:[%s223] sm:$0xff]
        %v328 = vadd.f32 %v303, %v304
        %v329 = vadd.f32 %v327, %v328
        %330 = vst [vmem:[%s223] sm:$0xff] %v329
        %s331 = scalar_lea.vmem %s223, 8 [#allocation7]
        %v332 = vld [vmem:[%s331] sm:$0xff]
        %v333 = vadd.f32 %v239, %v240
        %v334 = vadd.f32 %v332, %v333
        %335 = vst [vmem:[%s331] sm:$0xff] %v334
        %s336 = scalar_lea.vmem %s223, 16 [#allocation7]
        %v337 = vld [vmem:[%s336] sm:$0xff]
        %v338 = vmul.f32 %v303, %v239
        %v339 = vmul.f32 %v304, %v240
        %v340 = vadd.f32 %v338, %v339
        %v341 = vadd.f32 %v337, %v340
        %342 = vst [vmem:[%s336] sm:$0xff] %v341
        %s343 = scalar_lea.vmem %s223, 24 [#allocation7]
        %v344 = vld [vmem:[%s343] sm:$0xff]
        %v345 = vadd.f32 %v325, %v326
        %v346 = vadd.f32 %v344, %v345
        %347 = vst [vmem:[%s343] sm:$0xff] %v346
        %s348 = sand.u32 %s98, 1
        %s349 = scalar_lea.sflag [#allocation4], %s348
        %s350 = sand.u32 %s98, 1
        %s351 = smul.addr %s350, 32
        %s352 = scalar_lea.vmem [#allocation7], %s351
        // Predicated region
        $region41: #{tpu_custom_call.1} parent=27 // pred_check
          %p353 = pneg %p108
        $region42: #{tpu_custom_call.1} parent=27 // pred_check_branch
          %355 = sbr.rel (%p353) target = $region44
        $region43: #{tpu_custom_call.1} parent=27 // pred_region
          %s356 = smul.u32 4, %s26
          %358 = vsyncadd %s349, 0
          %s359 = smul.addr %s356, 8
          %s360 = scalar_lea.hbm %s2, %s359
          %s361 = sshll.u32 %s352, 4
          %s362 = int_to_ptr.vmem [resolvable:$true] %s361
          %s363 = sshll.u32 %s360, 4
          %s364 = int_to_ptr.hbm [resolvable:$true] %s363
          %369 = dma.vmem_to_hbm [thread:$0]  %s362, 512, %s364, %s349, 128, 128, 8
        $region44: #{tpu_custom_call.1} parent=27 // pred_fallthru
          _
      $region28: #{tpu_custom_call.1} parent=5 // pred_fallthru
        _
      %p370 = scmp.le.s32.totalorder 2, %s17
      // Predicated region
      $region45: #{tpu_custom_call.1} parent=5 // pred_check
        %p371 = pneg %p370
      $region46: #{tpu_custom_call.1} parent=5 // pred_check_branch
        %373 = sbr.rel (%p371) target = $region48
      $region47: #{tpu_custom_call.1} parent=5 // pred_region
        %s374 = ssub.s32 %s17, 2
        // Predicated region
        $region49: #{tpu_custom_call.1} parent=47 // pred_check
          %p375 = pneg %p114
        $region50: #{tpu_custom_call.1} parent=47 // pred_check_branch
          %377 = sbr.rel (%p375) target = $region52
        $region51: #{tpu_custom_call.1} parent=47 // pred_region
          %s378 = sand.u32 %s99, 1
          %s379 = scalar_lea.sflag [#allocation4], %s378
          %s380 = sand.u32 %s99, 1
          %s381 = smul.addr %s380, 32
          %s382 = scalar_lea.vmem [#allocation7], %s381
          %384 = dma.done %s379, 512
        $region52: #{tpu_custom_call.1} parent=47 // pred_fallthru
          _
      $region48: #{tpu_custom_call.1} parent=5 // pred_fallthru
        _
    $region6: #{tpu_custom_call.1} parent=1 // loop_footer
      %s21 = sadd.s32 1, %s17
    $region7: #{tpu_custom_call.1} parent=1 // loop_footer_branch
      %16 = sbr.rel target = $region3
    $region8: #{tpu_custom_call.1} parent=1 // loop_exit
      _
    %385 = vsyncpa [#allocation3], 1
    %s386 = scalar_lea.sflag [#allocation3], 1
    %387 = vsyncpa %s386, 1
    %388 = vsyncpa [#allocation6], 1
    %s389 = scalar_lea.sflag [#allocation6], 1
    %390 = vsyncpa %s389, 1
    %391 = vsyncpa [#allocation4], 1
    %s392 = scalar_lea.sflag [#allocation4], 1
    %393 = vsyncpa %s392, 1

</llo_original>
